<compile_context>
chip_gen: v5e
topology: v5e:2x2
jax: 0.10.0
libtpu: 0.0.40
codegen_flags: <defaults>
</compile_context>

<pallas_src>
import jax
import jax.numpy as jnp
from jax import lax
from jax.experimental import pallas as pl
from jax.experimental.pallas import tpu as pltpu


def _round_up(n, m):
    return ((n + m - 1) // m) * m


def _mlp_kernel(x_ref, w1_ref, b1_ref, w2_ref, b2_ref, o_ref):
    # Layer 1: Linear(input_dim, hidden) + ReLU.
    # MXU matmul with f32 accumulation; bias add / ReLU on the VPU in f32.
    h = jnp.dot(x_ref[...], w1_ref[...], preferred_element_type=jnp.float32)
    h = jnp.maximum(h + b1_ref[...], 0.0)                       # (tb, hidden) f32

    # Layer 2 (hidden -> 1), lane-dense: contract the hidden dim of the
    # (1, hidden) weight row against the hidden dim of h on the MXU, giving a
    # (1, tb) lane-major result so the output block is stored with full-width
    # vst + a dense writeback instead of a (tb, 1) masked-store column.
    z = lax.dot_general(w2_ref[...], h, (((1,), (1,)), ((), ())),
                        preferred_element_type=jnp.float32)     # (1, tb)

    # Bias (scalar from SMEM) + sigmoid (EUP).
    o_ref[...] = jax.nn.sigmoid(z + b2_ref[0, 0]).astype(o_ref.dtype)


def simple_nn_forward(x, w1, b1, w2, b2, *, block_batch=8192, x_buffer_count=None):
    """sigmoid(relu(x @ W1 + b1) @ W2 + b2).

    x : (B, input_dim); f32 or bf16 (cast upstream in the producer — this
        wrapper does NOT re-stream x through HBM to change its dtype).
    w1: (input_dim, hidden);  b1: (1, hidden) or (hidden,)
    w2: (hidden, 1) or (hidden,);  b2: (1, 1) or scalar
    Returns (B, 1) float32.
    """
    batch, input_dim = x.shape
    hidden = w1.shape[1]
    itemsize = jnp.dtype(x.dtype).itemsize

    # Tiny parameters: match w1 to x's dtype (MXU wants one input dtype);
    # all elementwise work stays f32.
    w1 = jnp.asarray(w1, x.dtype)
    b1_row = jnp.asarray(b1, jnp.float32).reshape(1, hidden)
    w2_row = jnp.asarray(w2, jnp.float32).reshape(1, hidden)    # lane-major row
    b2_s = jnp.asarray(b2, jnp.float32).reshape(1, 1)           # SMEM scalar

    # ---- batch tile --------------------------------------------------------
    tb = min(block_batch, _round_up(batch, 8))
    if batch >= 2048:
        # At least two tiles so the "parallel" axis can span both TCs on v7x.
        tb = min(tb, _round_up(pl.cdiv(batch, 2), 128))
    if tb < batch:
        # More than one tile: output blocks index the lane dim of the
        # (1, B_pad) result, so tb must be a multiple of 128.
        tb = _round_up(tb, 128)
    n_tiles = pl.cdiv(batch, tb)
    batch_pad = n_tiles * tb          # no jnp.pad of x — tail rows are OOB reads

    # ---- VMEM budget (minor dims lane-pad to 128, sublanes to 8) -----------
    lane = 128
    x_buf = tb * _round_up(input_dim, lane) * itemsize          # per x buffer
    h_buf = tb * _round_up(hidden, lane) * 4                    # f32 intermediate
    o_buf = 8 * tb * 4                                          # (1, tb) -> 8 sublanes
    w_buf = (_round_up(input_dim, 8) * _round_up(hidden, lane) * itemsize
             + 2 * 8 * _round_up(hidden, lane) * 4)
    vmem_est = 2 * x_buf + h_buf + 2 * o_buf + w_buf
    vmem_limit = int(min(max(2 * vmem_est + (2 << 20), 32 << 20), 64 << 20))

    # ---- advisory cost estimate for XLA scheduling -------------------------
    cost = pl.CostEstimate(
        flops=2 * batch * input_dim * hidden + 2 * batch * hidden,
        transcendentals=batch,                                  # sigmoid exp
        bytes_accessed=(batch * input_dim * itemsize            # x read
                        + batch * 4                             # out write
                        + input_dim * hidden * itemsize         # w1
                        + 2 * hidden * 4 + 4),                  # b1, w2, b2
    )

    x_spec_kwargs = {}
    if x_buffer_count is not None:
        # Optional deeper input pipelining (e.g. 3 on v7x if DMA stays exposed).
        x_spec_kwargs["pipeline_mode"] = pl.Buffered(x_buffer_count)

    out = pl.pallas_call(
        _mlp_kernel,
        out_shape=jax.ShapeDtypeStruct((1, batch_pad), jnp.float32),
        grid=(n_tiles,),
        in_specs=[
            # x: streamed per batch tile (auto double-buffered by Pallas).
            pl.BlockSpec((tb, input_dim), lambda i: (i, 0), **x_spec_kwargs),
            # Weights/biases: constant block index -> loaded once, VMEM-resident.
            pl.BlockSpec((input_dim, hidden), lambda i: (0, 0)),
            pl.BlockSpec((1, hidden), lambda i: (0, 0)),
            pl.BlockSpec((1, hidden), lambda i: (0, 0)),
            # b2: scalar via SMEM (avoids a padded VMEM vreg).
            pl.BlockSpec(memory_space=pltpu.MemorySpace.SMEM),
        ],
        # Lane-dense output: each tile writes a (1, tb) row of the (1, B_pad) slab.
        out_specs=pl.BlockSpec((1, tb), lambda i: (0, i)),
        compiler_params=pltpu.CompilerParams(
            dimension_semantics=("parallel",),
            vmem_limit_bytes=vmem_limit,
        ),
        cost_estimate=cost,
    )(x, w1, b1_row, w2_row, b2_s)

    # Tail lanes (>= batch) hold garbage from the OOB tail rows; slice them off.
    return out[0, :batch].reshape(batch, 1)


if __name__ == "__main__":
    input_dim, hidden = 16, 32

    key = jax.random.PRNGKey(0)
    kx, kw1, kb1, kw2, kb2 = jax.random.split(key, 5)

    # Deterministic parameter init (PyTorch-Linear-like uniform scale).
    s1 = 1.0 / input_dim ** 0.5
    s2 = 1.0 / hidden ** 0.5
    w1 = jax.random.uniform(kw1, (input_dim, hidden), jnp.float32, -s1, s1)
    b1 = jax.random.uniform(kb1, (1, hidden), jnp.float32, -s1, s1)
    w2 = jax.random.uniform(kw2, (hidden, 1), jnp.float32, -s2, s2)
    b2 = jax.random.uniform(kb2, (1, 1), jnp.float32, -s2, s2)

    def ref_fn(xv):
        xv = xv.astype(jnp.float32)
        return jax.nn.sigmoid(jnp.maximum(xv @ w1 + b1, 0.0) @ w2 + b2)

    # Small batch: single tile, grid=1.
    x_small = jax.random.normal(kx, (8, input_dim), dtype=jnp.float32)
    out_small = jax.block_until_ready(simple_nn_forward(x_small, w1, b1, w2, b2))
    assert out_small.shape == (8, 1)
    assert jnp.allclose(out_small, ref_fn(x_small), atol=1e-5, rtol=1e-5)

    # Non-multiple batch with grid > 1: exercises tiling + in-kernel tail handling
    # (no wrapper-side jnp.pad copy of x).
    x_big = jax.random.normal(kx, (300, input_dim), dtype=jnp.float32)
    out_big = jax.block_until_ready(
        simple_nn_forward(x_big, w1, b1, w2, b2, block_batch=128))
    assert out_big.shape == (300, 1)
    assert jnp.allclose(out_big, ref_fn(x_big), atol=1e-5, rtol=1e-5)

    # Default (large-tile) path on the same data: one 304-row tile.
    out_def = jax.block_until_ready(simple_nn_forward(x_big, w1, b1, w2, b2))
    assert out_def.shape == (300, 1)
    assert jnp.allclose(out_def, ref_fn(x_big), atol=1e-5, rtol=1e-5)

    # x produced upstream in bf16 (halves the dominant HBM read); no wrapper cast.
    x_bf16 = x_big.astype(jnp.bfloat16)
    out_bf16 = jax.block_until_ready(
        simple_nn_forward(x_bf16, w1, b1, w2, b2, block_batch=128))
    assert out_bf16.shape == (300, 1)
    assert jnp.allclose(out_bf16, ref_fn(x_bf16), atol=5e-2, rtol=5e-2)

    print("KERNEL_OK")
</pallas_src>

<mosaic_0001>
module attributes {stable_mosaic.version = 11 : i64} {
  func.func @_mlp_kernel(%arg0: i32, %arg1: memref<8x16xf32, #tpu.memory_space<vmem>>, %arg2: memref<16x32xf32, #tpu.memory_space<vmem>>, %arg3: memref<1x32xf32, #tpu.memory_space<vmem>>, %arg4: memref<1x32xf32, #tpu.memory_space<vmem>>, %arg5: memref<1x1xf32, #tpu.memory_space<smem>>, %arg6: memref<1x8xf32, #tpu.memory_space<vmem>>) attributes {dimension_semantics = [#tpu.dimension_semantics<parallel>], iteration_bounds = array<i64: 1>, scalar_prefetch = 0 : i64, scratch_operands = 0 : i64, tpu.core_type = #tpu.core_type<tc>, window_params = [{transform_indices = @transform_0, window_bounds = array<i64: 8, 16>}, {pipeline_mode = #tpu.pipeline_mode<synchronous>, transform_indices = @transform_1, window_bounds = array<i64: 16, 32>}, {pipeline_mode = #tpu.pipeline_mode<synchronous>, transform_indices = @transform_2, window_bounds = array<i64: 1, 32>}, {pipeline_mode = #tpu.pipeline_mode<synchronous>, transform_indices = @transform_3, window_bounds = array<i64: 1, 32>}, {transform_indices = @transform_4, window_bounds = array<i64: 1, 1>}, {transform_indices = @transform_5, window_bounds = array<i64: 1, 8>}]} {
    %c0 = arith.constant 0 : index
    %c0_0 = arith.constant 0 : index
    %0 = vector.load %arg1[%c0, %c0_0] : memref<8x16xf32, #tpu.memory_space<vmem>>, vector<8x16xf32>
    %c0_1 = arith.constant 0 : index
    %c0_2 = arith.constant 0 : index
    %1 = vector.load %arg2[%c0_1, %c0_2] : memref<16x32xf32, #tpu.memory_space<vmem>>, vector<16x32xf32>
    %cst = arith.constant dense<0.000000e+00> : vector<8x32xf32>
    %2 = tpu.matmul %0, %1, %cst {dimension_numbers = #tpu.dot_dimension_numbers<[1], [0], [0], [1], [0, 0, 1, 1], [], []>} : vector<8x16xf32>, vector<16x32xf32>, vector<8x32xf32> -> vector<8x32xf32>
    %c0_3 = arith.constant 0 : index
    %c0_4 = arith.constant 0 : index
    %3 = vector.load %arg3[%c0_3, %c0_4] : memref<1x32xf32, #tpu.memory_space<vmem>>, vector<1x32xf32>
    %4 = vector.broadcast %3 : vector<1x32xf32> to vector<8x32xf32>
    %5 = arith.addf %2, %4 : vector<8x32xf32>
    %cst_5 = arith.constant 0.000000e+00 : f32
    %6 = vector.broadcast %cst_5 : f32 to vector<8x32xf32>
    %7 = arith.maximumf %5, %6 : vector<8x32xf32>
    %c0_6 = arith.constant 0 : index
    %c0_7 = arith.constant 0 : index
    %8 = vector.load %arg4[%c0_6, %c0_7] : memref<1x32xf32, #tpu.memory_space<vmem>>, vector<1x32xf32>
    %cst_8 = arith.constant dense<0.000000e+00> : vector<1x8xf32>
    %9 = tpu.matmul %8, %7, %cst_8 {dimension_numbers = #tpu.dot_dimension_numbers<[1], [1], [0], [0], [0, 0, 1, 0], [], []>} : vector<1x32xf32>, vector<8x32xf32>, vector<1x8xf32> -> vector<1x8xf32>
    %c0_9 = arith.constant 0 : index
    %c0_10 = arith.constant 0 : index
    %10 = memref.load %arg5[%c0_9, %c0_10] : memref<1x1xf32, #tpu.memory_space<smem>>
    %11 = vector.broadcast %10 : f32 to vector<1x8xf32>
    %12 = arith.addf %9, %11 : vector<1x8xf32>
    %13 = arith.negf %12 : vector<1x8xf32>
    %14 = math.exp %13 : vector<1x8xf32>
    %cst_11 = arith.constant 1.000000e+00 : f32
    %15 = vector.broadcast %cst_11 : f32 to vector<1x8xf32>
    %16 = arith.addf %15, %14 : vector<1x8xf32>
    %17 = arith.divf %15, %16 : vector<1x8xf32>
    %c0_12 = arith.constant 0 : index
    %c0_13 = arith.constant 0 : index
    %18 = vector.load %arg6[%c0_12, %c0_13] : memref<1x8xf32, #tpu.memory_space<vmem>>, vector<1x8xf32>
    tpu.vector_store %arg6[%c0_12, %c0_13], %17 {strides = array<i32>} : memref<1x8xf32, #tpu.memory_space<vmem>>, vector<1x8xf32>,
    return
  }
  func.func @transform_0(%arg0: i32) -> (i32, i32) {
    %c0_i32 = arith.constant 0 : i32
    %c0_i32_0 = arith.constant 0 : i32
    return %arg0, %c0_i32 : i32, i32
  }
  func.func @transform_1(%arg0: i32) -> (i32, i32) {
    %c0_i32 = arith.constant 0 : i32
    %c0_i32_0 = arith.constant 0 : i32
    %c0_i32_1 = arith.constant 0 : i32
    return %c0_i32, %c0_i32_0 : i32, i32
  }
  func.func @transform_2(%arg0: i32) -> (i32, i32) {
    %c0_i32 = arith.constant 0 : i32
    %c0_i32_0 = arith.constant 0 : i32
    %c0_i32_1 = arith.constant 0 : i32
    return %c0_i32, %c0_i32_0 : i32, i32
  }
  func.func @transform_3(%arg0: i32) -> (i32, i32) {
    %c0_i32 = arith.constant 0 : i32
    %c0_i32_0 = arith.constant 0 : i32
    %c0_i32_1 = arith.constant 0 : i32
    return %c0_i32, %c0_i32_0 : i32, i32
  }
  func.func @transform_4(%arg0: i32) -> (i32, i32) {
    %c0_i32 = arith.constant 0 : i32
    %c0_i32_0 = arith.constant 0 : i32
    %c0_i32_1 = arith.constant 0 : i32
    return %c0_i32, %c0_i32_0 : i32, i32
  }
  func.func @transform_5(%arg0: i32) -> (i32, i32) {
    %c0_i32 = arith.constant 0 : i32
    %c0_i32_0 = arith.constant 0 : i32
    return %c0_i32, %arg0 : i32, i32
  }
}

</mosaic_0001>

<llo_original>
// kernel: tpu_custom_call.1
$region0: #{tpu_custom_call.1}
  #allocation0 [shape = 'u32[]', space=smem, size = 0x4, offset = 0x4, fixed_abs, tag = 'smem constant byte address 0x4 - core index']
  #allocation1 [shape = 'u32[72,128]{1,0:T(1,128)}', space=vmem, size = 0x9000, scoped, tag = 'internal scratch']
  #allocation2 [shape = 'f32[1,1]{1,0:T(1,128)S(6)}', space=smem, size = 0x200, scoped, tag = 'scoped memory for tpu_custom_call.1']
  %s0 = inlined_call_operand.hbm [shape: f32[8,16], index: 0, kind: input, shape index: {}]
  %s1 = inlined_call_operand.hbm [shape: f32[16,32], index: 1, kind: input, shape index: {}]
  %s2 = inlined_call_operand.vmem [shape: f32[1,32], index: 2, kind: input, shape index: {}]
  %s3 = inlined_call_operand.vmem [shape: f32[1,32], index: 3, kind: input, shape index: {}]
  %s4 = inlined_call_operand.<no memory space> [shape: f32[1,1], index: 4, kind: input, shape index: {}]
  %s5 = inlined_call_operand.hbm [shape: f32[1,8], index: 5, kind: output, shape index: {}]
  %s6 = sld [smem:[#allocation0]]
  $region38: #{tpu_custom_call.1} parent=0
    _
  %s8 = ssub.s32 1, %s6
  %s9 = scalar_select 0, %s8, %s6
  %10 = sst [smem:[#allocation2]] %s4
  $region1: #{tpu_custom_call.1} parent=0
    #allocation3 [shape = 'u8[4096]{0}', space=vmem, size = 0x1000, scoped, tag = 'input window, operand 0, single buffered']
    #allocation4 [shape = 's32[1]{0}', space=sflag, size = 0x4, scoped, tag = 'scoped memory for tpu_custom_call.1']
    #allocation5 [shape = 's32[1]{0}', space=sflag, size = 0x4, scoped, tag = 'scoped memory for tpu_custom_call.1']
    #allocation6 [shape = 'u8[8192]{0}', space=vmem, size = 0x2000, scoped, tag = 'input window, operand 1, single buffered']
    #allocation7 [shape = 's32[1]{0}', space=sflag, size = 0x4, scoped, tag = 'scoped memory for tpu_custom_call.1']
    #allocation8 [shape = 'u8[512]{0}', space=vmem, size = 0x400, scoped, tag = 'output window, operand 0, single buffered']
    %11 = vsyncpa [#allocation4], 0
    %12 = vsyncpa [#allocation7], 0
    %13 = vsyncpa [#allocation5], 0
    // Predicated region
    $region2: #{tpu_custom_call.1} parent=1 // pred_check
      _
    $region3: #{tpu_custom_call.1} parent=1 // pred_check_branch
      %15 = sbr.rel (0) target = $region5
    $region4: #{tpu_custom_call.1} parent=1 // pred_region
      %17 = vsyncadd [#allocation4], 0
      %s19 = sshll.u32 %s0, 4
      %s20 = int_to_ptr.hbm [resolvable:$true] %s19
      %s21 = sshll.u32 [#allocation3], 4
      %s22 = int_to_ptr.vmem [resolvable:$true] %s21
      %24 = dma.hbm_to_vmem [thread:$0]  %s20, 128, %s22, [#allocation4]
    $region5: #{tpu_custom_call.1} parent=1 // pred_fallthru
      _
    // Predicated region
    $region6: #{tpu_custom_call.1} parent=1 // pred_check
      _
    $region7: #{tpu_custom_call.1} parent=1 // pred_check_branch
      %26 = sbr.rel (0) target = $region9
    $region8: #{tpu_custom_call.1} parent=1 // pred_region
      %28 = vsyncadd [#allocation7], 0
      %s29 = sshll.u32 %s1, 4
      %s30 = int_to_ptr.hbm [resolvable:$true] %s29
      %s31 = sshll.u32 [#allocation6], 4
      %s32 = int_to_ptr.vmem [resolvable:$true] %s31
      %37 = dma.hbm_to_vmem [thread:$0]  %s30, 256, %s32, [#allocation7], 128, 128, 8
    $region9: #{tpu_custom_call.1} parent=1 // pred_fallthru
      _
    // Predicated region
    $region10: #{tpu_custom_call.1} parent=1 // pred_check
      _
    $region11: #{tpu_custom_call.1} parent=1 // pred_check_branch
      %39 = sbr.rel (0) target = $region13
    $region12: #{tpu_custom_call.1} parent=1 // pred_region
      _
    $region13: #{tpu_custom_call.1} parent=1 // pred_fallthru
      _
    // Predicated region
    $region14: #{tpu_custom_call.1} parent=1 // pred_check
      _
    $region15: #{tpu_custom_call.1} parent=1 // pred_check_branch
      %41 = sbr.rel (0) target = $region17
    $region16: #{tpu_custom_call.1} parent=1 // pred_region
      _
    $region17: #{tpu_custom_call.1} parent=1 // pred_fallthru
      _
    // Predicated region
    $region18: #{tpu_custom_call.1} parent=1 // pred_check
      _
    $region19: #{tpu_custom_call.1} parent=1 // pred_check_branch
      %43 = sbr.rel (0) target = $region21
    $region20: #{tpu_custom_call.1} parent=1 // pred_region
      _
    $region21: #{tpu_custom_call.1} parent=1 // pred_fallthru
      _
    // Predicated region
    $region22: #{tpu_custom_call.1} parent=1 // pred_check
      _
    $region23: #{tpu_custom_call.1} parent=1 // pred_check_branch
      %45 = sbr.rel (0) target = $region25
    $region24: #{tpu_custom_call.1} parent=1 // pred_region
      %47 = dma.done [#allocation4], 128
    $region25: #{tpu_custom_call.1} parent=1 // pred_fallthru
      _
    // Predicated region
    $region26: #{tpu_custom_call.1} parent=1 // pred_check
      _
    $region27: #{tpu_custom_call.1} parent=1 // pred_check_branch
      %49 = sbr.rel (0) target = $region29
    $region28: #{tpu_custom_call.1} parent=1 // pred_region
      %51 = dma.done [#allocation7], 256
    $region29: #{tpu_custom_call.1} parent=1 // pred_fallthru
      _
    %v52 = vld [vmem:[#allocation3] sm:$0xff]
    %v53 = vld [vmem:[#allocation6] sm:$0xff]
    %v54 = vld [vmem:[#allocation6 + $0x8] sm:$0xff]
    %v55 = vld [vmem:[%s2] sm:$0x1]
    %v57 = vperm.slane %v55, 0
    %vm59 = vcmask 130048
    %v61 = vsel %vm59, %v52, 0
    %63 = vmatpush.msra.mxu0 0.0
    %64 = vmatpush.msra.mxu0 0.0
    %65 = vmatpush.msra.mxu0 0.0
    %66 = vmatpush.msra.mxu0 0.0
    %67 = vmatpush.msra.mxu0 0.0
    %68 = vmatpush.msra.mxu0 0.0
    %69 = vmatpush.msra.mxu0 0.0
    %70 = vmatpush.msra.mxu0 0.0
    %71 = vmatpush.msra.mxu0 0.0
    %72 = vmatpush.msra.mxu0 0.0
    %73 = vmatpush.msra.mxu0 0.0
    %74 = vmatpush.msra.mxu0 0.0
    %75 = vmatpush.msra.mxu0 0.0
    %76 = vmatpush.msra.mxu0 0.0
    %77 = vmatpush.msra.mxu0 %v54
    %78 = vmatpush.msra.mxu0 %v53
    %79 = vmatmul.f32.gmra.mxu0 %v61
    %v80 = vpop.f32.mrf.mxu0
    %v81 = vadd.f32 %v57, %v80
    %82 = vdwg.mxu0
    %v83 = vmax.f32 %v81, 0.0
    %v84 = vld [vmem:[%s3] sm:$0x1]
    %s85 = sld [smem:[#allocation2]]
    %v86 = vstv %s85
    %vm87 = vcmask 261120
    %v89 = vsel %vm87, %v84, 0
    %v92 = vsel %vm87, %v83, 0
    %94 = vmatpush.xpose.msra.mxu0 0.0
    %95 = vmatpush.xpose.msra.mxu0 0.0
    %96 = vmatpush.xpose.msra.mxu0 0.0
    %97 = vmatpush.xpose.msra.mxu0 0.0
    %98 = vmatpush.xpose.msra.mxu0 0.0
    %99 = vmatpush.xpose.msra.mxu0 0.0
    %100 = vmatpush.xpose.msra.mxu0 0.0
    %101 = vmatpush.xpose.msra.mxu0 0.0
    %102 = vmatpush.xpose.msra.mxu0 0.0
    %103 = vmatpush.xpose.msra.mxu0 0.0
    %104 = vmatpush.xpose.msra.mxu0 0.0
    %105 = vmatpush.xpose.msra.mxu0 0.0
    %106 = vmatpush.xpose.msra.mxu0 0.0
    %107 = vmatpush.xpose.msra.mxu0 0.0
    %108 = vmatpush.xpose.msra.mxu0 0.0
    %109 = vmatpush.xpose.msra.mxu0 %v92
    %110 = vmatmul.f32.gmra.mxu0 %v89
    %v111 = vpop.f32.mrf.mxu0
    %v112 = vadd.f32 %v86, %v111
    %113 = vdwg.mxu0
    %v114 = vxor.u32 %v112, 2147483648
    %v115 = vmul.f32 %v114, 1.442695
    %v116 = vpow.pop %v115
    %v117 = vadd.f32 %v116, 1.0
    %v118 = vrcp.pop %v117
    %v119 = vmul.f32 %v117, %v118
    %v120 = vsub.f32 1.0, %v119
    %v121 = vmul.f32 %v118, %v120
    %v122 = vadd.f32 %v118, %v121
    %vm123 = vweird.f32 %v117
    %vm124 = vweird.f32 %v118
    %vm125 = vmor %vm123, %vm124
    %v126 = vsel %vm125, %v118, %v122
    %v127 = vand.u32 2147483647, %v117
    %vm128 = vcmp.eq.f32.partialorder %v127, 8.507059e+37
    %v129 = vand.u32 %v117, 2147483648
    %v130 = vor.u32 1.1754944e-38, %v129
    %v131 = vsel %vm128, %v130, %v126
    %v132 = vmul.f32 1.0, %v131
    %vm133 = vcmask 57344
    %134 = vst.msk [vmem:[#allocation8] sm:$0x1] %vm133, %v132
    // Predicated region
    $region30: #{tpu_custom_call.1} parent=1 // pred_check
      _
    $region31: #{tpu_custom_call.1} parent=1 // pred_check_branch
      %136 = sbr.rel (0) target = $region33
    $region32: #{tpu_custom_call.1} parent=1 // pred_region
      %138 = vsyncadd [#allocation5], 0
      %s140 = sshll.u32 [#allocation8], 4
      %s141 = int_to_ptr.vmem [resolvable:$true] %s140
      %s142 = sshll.u32 %s5, 4
      %s143 = int_to_ptr.hbm [resolvable:$true] %s142
      %145 = dma.vmem_to_hbm [thread:$0]  %s141, 16, %s143, [#allocation5]
    $region33: #{tpu_custom_call.1} parent=1 // pred_fallthru
      _
    // Predicated region
    $region34: #{tpu_custom_call.1} parent=1 // pred_check
      _
    $region35: #{tpu_custom_call.1} parent=1 // pred_check_branch
      %147 = sbr.rel (0) target = $region37
    $region36: #{tpu_custom_call.1} parent=1 // pred_region
      %149 = dma.done [#allocation5], 16
    $region37: #{tpu_custom_call.1} parent=1 // pred_fallthru
      _
    %150 = vsyncpa [#allocation4], 1
    %151 = vsyncpa [#allocation7], 1
    %152 = vsyncpa [#allocation5], 1

</llo_original>
